<compile_context>
chip_gen: v7x
topology: tpu7x:2x2x1
jax: 0.10.0
libtpu: 0.0.40
codegen_flags: <defaults>
</compile_context>

<pallas_src>
import jax
import jax.numpy as jnp
from jax.experimental import pallas as pl
from jax.experimental.pallas import tpu as pltpu

_EPS = 1e-8  # torch.nn.CosineSimilarity default


def _cosine_distance_kernel(pred_ref, true_ref, out_ref):
    p = pred_ref[...].astype(jnp.float32)          # (tile_b, C)
    t = true_ref[...].astype(jnp.float32)          # (tile_b, C)

    dot = jnp.sum(p * t, axis=-1, keepdims=True)   # (tile_b, 1)
    pn = jnp.sum(p * p, axis=-1, keepdims=True)
    tn = jnp.sum(t * t, axis=-1, keepdims=True)

    eps = jnp.float32(_EPS)
    denom = jnp.maximum(jnp.sqrt(pn), eps) * jnp.maximum(jnp.sqrt(tn), eps)
    out_ref[...] = (jnp.float32(1.0) - dot / denom).astype(out_ref.dtype)


def _choose_tile_b(b_rounded, c, target_vmem_block_bytes=2 << 20):
    """Largest batch tile whose VMEM footprint (lane-padded) stays ~target."""
    c_lanes = max(128, ((c + 127) // 128) * 128)   # VMEM pads last dim to 128 lanes
    rows = target_vmem_block_bytes // (c_lanes * 4)
    rows = max(8, (rows // 8) * 8)                 # keep (8, 128) tiling alignment
    return int(min(rows, b_rounded))


def cosine_similarity_distance(y_pred, y_true):
    """Returns 1 - cosine_similarity(y_pred, y_true, dim=1, eps=1e-8), shape (B,)."""
    assert y_pred.shape == y_true.shape
    assert y_pred.ndim == 2, "expects (batch, channels); nn.CosineSimilarity reduces over dim=1"
    B, C = y_pred.shape

    b_rounded = ((B + 7) // 8) * 8
    tile_b = _choose_tile_b(b_rounded, C)
    b_pad = ((B + tile_b - 1) // tile_b) * tile_b

    if b_pad != B:
        pad = ((0, b_pad - B), (0, 0))
        y_pred_p = jnp.pad(y_pred, pad)
        y_true_p = jnp.pad(y_true, pad)
    else:
        y_pred_p, y_true_p = y_pred, y_true

    out = pl.pallas_call(
        _cosine_distance_kernel,
        out_shape=jax.ShapeDtypeStruct((b_pad, 1), jnp.float32),
        grid_spec=pltpu.PrefetchScalarGridSpec(
            num_scalar_prefetch=0,
            grid=(b_pad // tile_b,),
            in_specs=[
                pl.BlockSpec((tile_b, C), lambda i: (i, 0)),   # y_pred tile
                pl.BlockSpec((tile_b, C), lambda i: (i, 0)),   # y_true tile
            ],
            out_specs=pl.BlockSpec((tile_b, 1), lambda i: (i, 0)),
        ),
        compiler_params=pltpu.CompilerParams(
            dimension_semantics=("parallel",),   # independent tiles -> megacore-friendly
        ),
    )(y_pred_p, y_true_p)

    return out[:B, 0].astype(y_pred.dtype)


if __name__ == "__main__":
    key = jax.random.PRNGKey(0)
    k1, k2 = jax.random.split(key)

    B, C = 16, 32
    y_pred = jax.random.normal(k1, (B, C), dtype=jnp.float32)
    y_true = jax.random.normal(k2, (B, C), dtype=jnp.float32)

    out = cosine_similarity_distance(y_pred, y_true)
    out = jax.block_until_ready(out)

    # reference in plain JAX (matches torch.nn.CosineSimilarity(dim=1, eps=1e-8))
    dot = jnp.sum(y_pred * y_true, axis=1)
    n_p = jnp.maximum(jnp.sqrt(jnp.sum(y_pred * y_pred, axis=1)), _EPS)
    n_t = jnp.maximum(jnp.sqrt(jnp.sum(y_true * y_true, axis=1)), _EPS)
    ref = 1.0 - dot / (n_p * n_t)

    assert out.shape == (B,), out.shape
    assert jnp.allclose(out, ref, rtol=1e-6, atol=1e-6), (out, ref)

    print("KERNEL_OK")
</pallas_src>

<mosaic_0001>
module attributes {stable_mosaic.version = 11 : i64} {
  func.func @_cosine_distance_kernel(%arg0: i32, %arg1: memref<16x32xf32, #tpu.memory_space<vmem>>, %arg2: memref<16x32xf32, #tpu.memory_space<vmem>>, %arg3: memref<16x1xf32, #tpu.memory_space<vmem>>) attributes {dimension_semantics = [#tpu.dimension_semantics<parallel>], iteration_bounds = array<i64: 1>, scalar_prefetch = 0 : i64, scratch_operands = 0 : i64, tpu.core_type = #tpu.core_type<tc>, window_params = [{transform_indices = @transform_0, window_bounds = array<i64: 16, 32>}, {transform_indices = @transform_1, window_bounds = array<i64: 16, 32>}, {transform_indices = @transform_2, window_bounds = array<i64: 16, 1>}]} {
    %c0 = arith.constant 0 : index
    %c0_0 = arith.constant 0 : index
    %0 = vector.load %arg1[%c0, %c0_0] : memref<16x32xf32, #tpu.memory_space<vmem>>, vector<16x32xf32>
    %c0_1 = arith.constant 0 : index
    %c0_2 = arith.constant 0 : index
    %1 = vector.load %arg2[%c0_1, %c0_2] : memref<16x32xf32, #tpu.memory_space<vmem>>, vector<16x32xf32>
    %2 = arith.mulf %0, %1 : vector<16x32xf32>
    %cst = arith.constant dense<0.000000e+00> : vector<16xf32>
    %3 = vector.multi_reduction <add>, %2, %cst [1] : vector<16x32xf32> to vector<16xf32>
    %4 = vector.shape_cast %3 : vector<16xf32> to vector<16x1xf32>
    %5 = arith.mulf %0, %0 : vector<16x32xf32>
    %cst_3 = arith.constant dense<0.000000e+00> : vector<16xf32>
    %6 = vector.multi_reduction <add>, %5, %cst_3 [1] : vector<16x32xf32> to vector<16xf32>
    %7 = vector.shape_cast %6 : vector<16xf32> to vector<16x1xf32>
    %8 = arith.mulf %1, %1 : vector<16x32xf32>
    %cst_4 = arith.constant dense<0.000000e+00> : vector<16xf32>
    %9 = vector.multi_reduction <add>, %8, %cst_4 [1] : vector<16x32xf32> to vector<16xf32>
    %10 = vector.shape_cast %9 : vector<16xf32> to vector<16x1xf32>
    %11 = math.sqrt %7 : vector<16x1xf32>
    %cst_5 = arith.constant 9.99999993E-9 : f32
    %12 = vector.broadcast %cst_5 : f32 to vector<16x1xf32>
    %13 = arith.maximumf %11, %12 : vector<16x1xf32>
    %14 = math.sqrt %10 : vector<16x1xf32>
    %cst_6 = arith.constant 9.99999993E-9 : f32
    %15 = vector.broadcast %cst_6 : f32 to vector<16x1xf32>
    %16 = arith.maximumf %14, %15 : vector<16x1xf32>
    %17 = arith.mulf %13, %16 : vector<16x1xf32>
    %18 = arith.divf %4, %17 : vector<16x1xf32>
    %cst_7 = arith.constant 1.000000e+00 : f32
    %19 = vector.broadcast %cst_7 : f32 to vector<16x1xf32>
    %20 = arith.subf %19, %18 : vector<16x1xf32>
    %c0_8 = arith.constant 0 : index
    %c0_9 = arith.constant 0 : index
    %21 = vector.load %arg3[%c0_8, %c0_9] : memref<16x1xf32, #tpu.memory_space<vmem>>, vector<16x1xf32>
    tpu.vector_store %arg3[%c0_8, %c0_9], %20 {strides = array<i32>} : memref<16x1xf32, #tpu.memory_space<vmem>>, vector<16x1xf32>,
    return
  }
  func.func @transform_0(%arg0: i32) -> (i32, i32) {
    %c0_i32 = arith.constant 0 : i32
    %c0_i32_0 = arith.constant 0 : i32
    return %arg0, %c0_i32 : i32, i32
  }
  func.func @transform_1(%arg0: i32) -> (i32, i32) {
    %c0_i32 = arith.constant 0 : i32
    %c0_i32_0 = arith.constant 0 : i32
    return %arg0, %c0_i32 : i32, i32
  }
  func.func @transform_2(%arg0: i32) -> (i32, i32) {
    %c0_i32 = arith.constant 0 : i32
    %c0_i32_0 = arith.constant 0 : i32
    return %arg0, %c0_i32 : i32, i32
  }
}

</mosaic_0001>

<llo_original>
// kernel: tpu_custom_call.1
$region0: #{tpu_custom_call.1}
  #allocation0 [shape = 'u32[]', space=smem, size = 0x4, offset = 0x4, fixed_abs, tag = 'smem constant byte address 0x4 - core index']
  #allocation1 [shape = 'u32[144,128]{1,0:T(1,128)}', space=vmem, size = 0x12000, scoped, tag = 'internal scratch']
  %s0 = inlined_call_operand.hbm [shape: f32[16,32], index: 0, kind: input, shape index: {}]
  %s1 = inlined_call_operand.hbm [shape: f32[16,32], index: 1, kind: input, shape index: {}]
  %s2 = inlined_call_operand.vmem [shape: f32[16,1], index: 2, kind: output, shape index: {}]
  %s3 = sld [smem:[#allocation0]]
  $region26: #{tpu_custom_call.1} parent=0
    _
  %s5 = ssub.s32 1, %s3
  %s6 = scalar_select 0, %s5, %s3
  $region1: #{tpu_custom_call.1} parent=0
    #allocation2 [shape = 'u8[8192]{0}', space=vmem, size = 0x2000, scoped, tag = 'input window, operand 0, single buffered']
    #allocation3 [shape = 's32[1]{0}', space=sflag, size = 0x4, scoped, tag = 'scoped memory for tpu_custom_call.1']
    #allocation4 [shape = 'u8[8192]{0}', space=vmem, size = 0x2000, scoped, tag = 'input window, operand 1, single buffered']
    #allocation5 [shape = 's32[1]{0}', space=sflag, size = 0x4, scoped, tag = 'scoped memory for tpu_custom_call.1']
    %7 = vsyncpa [#allocation3], 0
    %8 = vsyncpa [#allocation5], 0
    // Predicated region
    $region2: #{tpu_custom_call.1} parent=1 // pred_check
      _
    $region3: #{tpu_custom_call.1} parent=1 // pred_check_branch
      %10 = sbr.rel (0) target = $region5
    $region4: #{tpu_custom_call.1} parent=1 // pred_region
      %s12 = ssub.s32 256, 256
      %13 = vsyncadd [#allocation3], %s12
      %s14 = sshll.u32 [#allocation2], 4
      %s15 = int_to_ptr.vmem [resolvable:$true] %s14
      %20 = dma.hbm_to_vmem [thread:$0]  %s0, 256, %s15, [#allocation3], 128, 128, 8
    $region5: #{tpu_custom_call.1} parent=1 // pred_fallthru
      _
    // Predicated region
    $region6: #{tpu_custom_call.1} parent=1 // pred_check
      _
    $region7: #{tpu_custom_call.1} parent=1 // pred_check_branch
      %22 = sbr.rel (0) target = $region9
    $region8: #{tpu_custom_call.1} parent=1 // pred_region
      %s24 = ssub.s32 256, 256
      %25 = vsyncadd [#allocation5], %s24
      %s26 = sshll.u32 [#allocation4], 4
      %s27 = int_to_ptr.vmem [resolvable:$true] %s26
      %32 = dma.hbm_to_vmem [thread:$0]  %s1, 256, %s27, [#allocation5], 128, 128, 8
    $region9: #{tpu_custom_call.1} parent=1 // pred_fallthru
      _
    // Predicated region
    $region10: #{tpu_custom_call.1} parent=1 // pred_check
      _
    $region11: #{tpu_custom_call.1} parent=1 // pred_check_branch
      %34 = sbr.rel (0) target = $region13
    $region12: #{tpu_custom_call.1} parent=1 // pred_region
      %35 = dma.done [#allocation3], 256
    $region13: #{tpu_custom_call.1} parent=1 // pred_fallthru
      _
    // Predicated region
    $region14: #{tpu_custom_call.1} parent=1 // pred_check
      _
    $region15: #{tpu_custom_call.1} parent=1 // pred_check_branch
      %37 = sbr.rel (0) target = $region17
    $region16: #{tpu_custom_call.1} parent=1 // pred_region
      %38 = dma.done [#allocation5], 256
    $region17: #{tpu_custom_call.1} parent=1 // pred_fallthru
      _
    %v39 = vld [vmem:[#allocation2] sm:$0xff]
    %v40 = vld [vmem:[#allocation2 + $0x8] sm:$0xff]
    %v41 = vld [vmem:[#allocation4] sm:$0xff]
    %v42 = vld [vmem:[#allocation4 + $0x8] sm:$0xff]
    %v43 = vmul.f32 %v39, %v41
    %v44 = vmul.f32 %v40, %v42
    %vm45 = vcmask 261120
    %v46 = vsel %vm45, %v43, 0.0
    %47 = vadd.xlane.f32.xlu0 %v46
    %v48 = vpop.xlane.xlu0 %47
    %v49 = vsel %vm45, %v44, 0.0
    %50 = vadd.xlane.f32.xlu0 %v49
    %v51 = vpop.xlane.xlu0 %50
    %v52 = vmul.f32 %v39, %v39
    %v53 = vmul.f32 %v40, %v40
    %v54 = vsel %vm45, %v52, 0.0
    %55 = vadd.xlane.f32.xlu0 %v54
    %v56 = vpop.xlane.xlu0 %55
    %v57 = vsel %vm45, %v53, 0.0
    %58 = vadd.xlane.f32.xlu0 %v57
    %v59 = vpop.xlane.xlu0 %58
    %v60 = vmul.f32 %v41, %v41
    %v61 = vmul.f32 %v42, %v42
    %v62 = vsel %vm45, %v60, 0.0
    %63 = vadd.xlane.f32.xlu0 %v62
    %v64 = vpop.xlane.xlu0 %63
    %v65 = vsel %vm45, %v61, 0.0
    %66 = vadd.xlane.f32.xlu0 %v65
    %v67 = vpop.xlane.xlu0 %66
    %v68 = vrsqrt.pop %v56
    %v69 = vmul.f32 %v56, %v68
    %vm70 = vcmp.eq.f32.partialorder %v56, inf
    %v71 = vsel %vm70, %v56, %v69
    %vm72 = vcmp.eq.f32.partialorder %v56, 0.0
    %v73 = vand.u32 %v56, 2147483648
    %v74 = vsel %vm72, %v73, %v71
    %v75 = vrsqrt.pop %v59
    %v76 = vmul.f32 %v59, %v75
    %vm77 = vcmp.eq.f32.partialorder %v59, inf
    %v78 = vsel %vm77, %v59, %v76
    %vm79 = vcmp.eq.f32.partialorder %v59, 0.0
    %v80 = vand.u32 %v59, 2147483648
    %v81 = vsel %vm79, %v80, %v78
    %v82 = vmax.f32 %v74, 1e-08
    %v83 = vmax.f32 %v81, 1e-08
    %v84 = vrsqrt.pop %v64
    %v85 = vmul.f32 %v64, %v84
    %vm86 = vcmp.eq.f32.partialorder %v64, inf
    %v87 = vsel %vm86, %v64, %v85
    %vm88 = vcmp.eq.f32.partialorder %v64, 0.0
    %v89 = vand.u32 %v64, 2147483648
    %v90 = vsel %vm88, %v89, %v87
    %v91 = vrsqrt.pop %v67
    %v92 = vmul.f32 %v67, %v91
    %vm93 = vcmp.eq.f32.partialorder %v67, inf
    %v94 = vsel %vm93, %v67, %v92
    %vm95 = vcmp.eq.f32.partialorder %v67, 0.0
    %v96 = vand.u32 %v67, 2147483648
    %v97 = vsel %vm95, %v96, %v94
    %v98 = vmax.f32 %v90, 1e-08
    %v99 = vmax.f32 %v97, 1e-08
    %v100 = vmul.f32 %v82, %v98
    %v101 = vmul.f32 %v83, %v99
    %v102 = vrcp.pop %v100
    %v103 = vmul.f32 %v48, %v102
    %v104 = vrcp.pop %v101
    %v105 = vmul.f32 %v51, %v104
    %v106 = vsub.f32 1.0, %v103
    %v107 = vsub.f32 1.0, %v105
    %vm108 = vcmask 7168
    %109 = vst.msk [vmem:[%s2] sm:$0xff] %vm108, %v106
    %110 = vst.msk [vmem:[%s2 + $0x8] sm:$0xff] %vm108, %v107
    // Predicated region
    $region18: #{tpu_custom_call.1} parent=1 // pred_check
      _
    $region19: #{tpu_custom_call.1} parent=1 // pred_check_branch
      %112 = sbr.rel (0) target = $region21
    $region20: #{tpu_custom_call.1} parent=1 // pred_region
      _
    $region21: #{tpu_custom_call.1} parent=1 // pred_fallthru
      _
    // Predicated region
    $region22: #{tpu_custom_call.1} parent=1 // pred_check
      _
    $region23: #{tpu_custom_call.1} parent=1 // pred_check_branch
      %114 = sbr.rel (0) target = $region25
    $region24: #{tpu_custom_call.1} parent=1 // pred_region
      _
    $region25: #{tpu_custom_call.1} parent=1 // pred_fallthru
      _
    %115 = vsyncpa [#allocation3], 1
    %116 = vsyncpa [#allocation5], 1

</llo_original>
